<compile_context>
chip_gen: v6e
topology: v6e:2x2x1
jax: 0.10.0
libtpu: 0.0.40
codegen_flags: <defaults>
</compile_context>

<pallas_src>
import jax
import jax.numpy as jnp
from jax import lax
from jax.experimental import pallas as pl
from jax.experimental.pallas import tpu as pltpu


def _round_up(x: int, m: int) -> int:
    return (x + m - 1) // m * m


# ----------------------------------------------------------------------------
# Kernel 1: fused projection.  proj = xs @ W_cat + b_cat
#   xs_ref  : [tm, Dp]        (row tile of the padded sequence)
#   w_ref   : [Dp, 2*Dp]      (pre-transposed, fused dep|hed weight, resident)
#   b_ref   : [1, 2*Dp]       (fused bias, resident)
#   proj_ref: [tm, 2*Dp]      (lanes [0:Dp) = deps, lanes [Dp:2Dp) = heds)
# ----------------------------------------------------------------------------
def _proj_kernel(xs_ref, w_ref, b_ref, proj_ref):
    proj_ref[...] = (
        jnp.dot(xs_ref[...], w_ref[...], preferred_element_type=jnp.float32)
        + b_ref[...]
    ).astype(proj_ref.dtype)


# ----------------------------------------------------------------------------
# Kernel 2: pairwise scores.  out = deps @ heds.T  (contract last dims; no .T)
#   deps_ref: [tm, Dp]   (lane-block 0 of proj -> dep projections)
#   heds_ref: [tn, Dp]   (row tile of heds_full: row 0 = root, 1..N = heds)
#   out_ref : [tm, tn]   (lane-dense, tn is a multiple of 128)
# ----------------------------------------------------------------------------
def _score_kernel(deps_ref, heds_ref, out_ref):
    out_ref[...] = lax.dot_general(
        deps_ref[...], heds_ref[...],
        dimension_numbers=(((1,), (1,)), ((), ())),
        preferred_element_type=jnp.float32,
    ).astype(out_ref.dtype)


def biaffine(xs, w_dep, b_dep, w_hed, b_hed, root, *,
             compute_dtype=jnp.float32, tm_max=256, tn_max=256):
    """xs: [N, D]; weights [D, D] (PyTorch layout); biases/root [D].

    Returns [N, N+1] float32 (column 0 = root score).
    """
    n, d = xs.shape
    f32 = jnp.float32

    # --- wrapper-side layout plumbing (all exact: padding is zeros) ----------
    dp = _round_up(d, 128)                       # lane-pad the embedding dim
    tm = min(tm_max, _round_up(n, 8))            # sublane-aligned row tile
    np_rows = _round_up(n, tm)
    tn = min(tn_max, _round_up(n + 1, 128))      # lane-aligned output col tile
    n_cols = _round_up(n + 1, tn)

    xs_p = jnp.zeros((np_rows, dp), compute_dtype)
    xs_p = xs_p.at[:n, :d].set(xs.astype(compute_dtype))

    # Fused, pre-transposed weight: [D_in, 2*D_out] = [Wd.T | Wh.T] (padded).
    w_cat = jnp.zeros((dp, 2 * dp), compute_dtype)
    w_cat = w_cat.at[:d, :d].set(w_dep.T.astype(compute_dtype))
    w_cat = w_cat.at[:d, dp:dp + d].set(w_hed.T.astype(compute_dtype))
    b_cat = jnp.zeros((1, 2 * dp), f32)
    b_cat = b_cat.at[0, :d].set(b_dep.astype(f32))
    b_cat = b_cat.at[0, dp:dp + d].set(b_hed.astype(f32))

    cparams = pltpu.CompilerParams(
        dimension_semantics=("parallel",),
        vmem_limit_bytes=32 * 1024 * 1024,
    )

    # --- stage 1: fused dep/hed projection, tiled over rows ------------------
    proj = pl.pallas_call(
        _proj_kernel,
        out_shape=jax.ShapeDtypeStruct((np_rows, 2 * dp), compute_dtype),
        grid_spec=pltpu.PrefetchScalarGridSpec(
            num_scalar_prefetch=0,
            grid=(np_rows // tm,),
            in_specs=[
                pl.BlockSpec((tm, dp), lambda i: (i, 0)),
                pl.BlockSpec((dp, 2 * dp), lambda i: (0, 0)),   # resident
                pl.BlockSpec((1, 2 * dp), lambda i: (0, 0)),    # resident
            ],
            out_specs=pl.BlockSpec((tm, 2 * dp), lambda i: (i, 0)),
        ),
        compiler_params=cparams,
    )(xs_p, w_cat, b_cat)

    # heds_full: row 0 = root, rows 1..N = hed projections, rest zero.
    root_p = jnp.zeros((dp,), compute_dtype).at[:d].set(root.astype(compute_dtype))
    heds_full = jnp.zeros((n_cols, dp), compute_dtype)
    heds_full = heds_full.at[0, :].set(root_p)
    heds_full = heds_full.at[1:n + 1, :].set(proj[:n, dp:])

    # --- stage 2: pairwise scores, tiled over (rows, output columns) ---------
    # deps is read straight out of `proj` via its lane-block 0 (no copy).
    # TODO(synk): for very large embedding sizes add a K grid axis; here the
    # full (padded) D is contracted in one block, which fits typical D <= ~2048.
    cparams2 = pltpu.CompilerParams(
        dimension_semantics=("parallel", "parallel"),
        vmem_limit_bytes=32 * 1024 * 1024,
    )
    out_p = pl.pallas_call(
        _score_kernel,
        out_shape=jax.ShapeDtypeStruct((np_rows, n_cols), jnp.float32),
        grid_spec=pltpu.PrefetchScalarGridSpec(
            num_scalar_prefetch=0,
            grid=(np_rows // tm, n_cols // tn),
            in_specs=[
                pl.BlockSpec((tm, dp), lambda i, j: (i, 0)),   # deps half of proj
                pl.BlockSpec((tn, dp), lambda i, j: (j, 0)),   # heds_full tile
            ],
            out_specs=pl.BlockSpec((tm, tn), lambda i, j: (i, j)),
        ),
        compiler_params=cparams2,
    )(proj, heds_full)

    return out_p[:n, :n + 1]


def biaffine_ref(xs, w_dep, b_dep, w_hed, b_hed, root):
    deps = xs @ w_dep.T + b_dep
    heds = jnp.concatenate([root[None, :], xs @ w_hed.T + b_hed], axis=0)
    return deps @ heds.T


def _make_inputs(key, n, d):
    k_xs, k_wd, k_bd, k_wh, k_bh, k_root = jax.random.split(key, 6)
    xs = jax.random.normal(k_xs, (n, d), dtype=jnp.float32)
    w_dep = jax.random.normal(k_wd, (d, d), dtype=jnp.float32) * 0.1
    b_dep = jax.random.normal(k_bd, (d,), dtype=jnp.float32) * 0.1
    w_hed = jax.random.normal(k_wh, (d, d), dtype=jnp.float32) * 0.1
    b_hed = jax.random.normal(k_bh, (d,), dtype=jnp.float32) * 0.1
    root = jax.random.normal(k_root, (d,), dtype=jnp.float32)
    return xs, w_dep, b_dep, w_hed, b_hed, root


if __name__ == "__main__":
    key = jax.random.PRNGKey(0)

    # Small module-scale shapes (single tile along each grid axis).
    N, D = 8, 32
    args = _make_inputs(key, N, D)
    out = jax.block_until_ready(biaffine(*args))
    expected = biaffine_ref(*args)
    assert out.shape == (N, N + 1), out.shape
    assert jnp.allclose(out, expected, atol=1e-4, rtol=1e-4), (
        float(jnp.max(jnp.abs(out - expected))))

    # Larger, non-aligned shape that exercises the multi-tile grid + padding.
    N2, D2 = 200, 96
    args2 = _make_inputs(jax.random.PRNGKey(1), N2, D2)
    out2 = jax.block_until_ready(biaffine(*args2, tm_max=64, tn_max=128))
    expected2 = biaffine_ref(*args2)
    assert out2.shape == (N2, N2 + 1), out2.shape
    assert jnp.allclose(out2, expected2, atol=1e-3, rtol=1e-4), (
        float(jnp.max(jnp.abs(out2 - expected2))))

    print("KERNEL_OK")
</pallas_src>

<mosaic_0001>
module attributes {stable_mosaic.version = 11 : i64} {
  func.func @_proj_kernel(%arg0: i32, %arg1: memref<8x128xf32, #tpu.memory_space<vmem>>, %arg2: memref<128x256xf32, #tpu.memory_space<vmem>>, %arg3: memref<1x256xf32, #tpu.memory_space<vmem>>, %arg4: memref<8x256xf32, #tpu.memory_space<vmem>>) attributes {dimension_semantics = [#tpu.dimension_semantics<parallel>], iteration_bounds = array<i64: 1>, scalar_prefetch = 0 : i64, scratch_operands = 0 : i64, tpu.core_type = #tpu.core_type<tc>, window_params = [{transform_indices = @transform_0, window_bounds = array<i64: 8, 128>}, {pipeline_mode = #tpu.pipeline_mode<synchronous>, transform_indices = @transform_1, window_bounds = array<i64: 128, 256>}, {pipeline_mode = #tpu.pipeline_mode<synchronous>, transform_indices = @transform_2, window_bounds = array<i64: 1, 256>}, {transform_indices = @transform_3, window_bounds = array<i64: 8, 256>}]} {
    %c0 = arith.constant 0 : index
    %c0_0 = arith.constant 0 : index
    %0 = vector.load %arg1[%c0, %c0_0] : memref<8x128xf32, #tpu.memory_space<vmem>>, vector<8x128xf32>
    %c0_1 = arith.constant 0 : index
    %c0_2 = arith.constant 0 : index
    %1 = vector.load %arg2[%c0_1, %c0_2] : memref<128x256xf32, #tpu.memory_space<vmem>>, vector<128x256xf32>
    %cst = arith.constant dense<0.000000e+00> : vector<8x256xf32>
    %2 = tpu.matmul %0, %1, %cst {dimension_numbers = #tpu.dot_dimension_numbers<[1], [0], [0], [1], [0, 0, 1, 1], [], []>} : vector<8x128xf32>, vector<128x256xf32>, vector<8x256xf32> -> vector<8x256xf32>
    %c0_3 = arith.constant 0 : index
    %c0_4 = arith.constant 0 : index
    %3 = vector.load %arg3[%c0_3, %c0_4] : memref<1x256xf32, #tpu.memory_space<vmem>>, vector<1x256xf32>
    %4 = vector.broadcast %3 : vector<1x256xf32> to vector<8x256xf32>
    %5 = arith.addf %2, %4 : vector<8x256xf32>
    %c0_5 = arith.constant 0 : index
    %c0_6 = arith.constant 0 : index
    %6 = vector.load %arg4[%c0_5, %c0_6] : memref<8x256xf32, #tpu.memory_space<vmem>>, vector<8x256xf32>
    tpu.vector_store %arg4[%c0_5, %c0_6], %5 {strides = array<i32>} : memref<8x256xf32, #tpu.memory_space<vmem>>, vector<8x256xf32>,
    return
  }
  func.func @transform_0(%arg0: i32) -> (i32, i32) {
    %c0_i32 = arith.constant 0 : i32
    %c0_i32_0 = arith.constant 0 : i32
    return %arg0, %c0_i32 : i32, i32
  }
  func.func @transform_1(%arg0: i32) -> (i32, i32) {
    %c0_i32 = arith.constant 0 : i32
    %c0_i32_0 = arith.constant 0 : i32
    %c0_i32_1 = arith.constant 0 : i32
    return %c0_i32, %c0_i32_0 : i32, i32
  }
  func.func @transform_2(%arg0: i32) -> (i32, i32) {
    %c0_i32 = arith.constant 0 : i32
    %c0_i32_0 = arith.constant 0 : i32
    %c0_i32_1 = arith.constant 0 : i32
    return %c0_i32, %c0_i32_0 : i32, i32
  }
  func.func @transform_3(%arg0: i32) -> (i32, i32) {
    %c0_i32 = arith.constant 0 : i32
    %c0_i32_0 = arith.constant 0 : i32
    return %arg0, %c0_i32 : i32, i32
  }
}

</mosaic_0001>

<llo_original>
// kernel: tpu_custom_call.1
$region0: #{tpu_custom_call.1}
  #allocation0 [shape = 'u32[]', space=smem, size = 0x4, offset = 0x4, fixed_abs, tag = 'smem constant byte address 0x4 - core index']
  #allocation1 [shape = 'u32[144,128]{1,0:T(1,128)}', space=vmem, size = 0x12000, scoped, tag = 'internal scratch']
  %s0 = inlined_call_operand.hbm [shape: f32[8,128], index: 0, kind: input, shape index: {}]
  %s1 = inlined_call_operand.hbm [shape: f32[128,256], index: 1, kind: input, shape index: {}]
  %s2 = inlined_call_operand.vmem [shape: f32[1,256], index: 2, kind: input, shape index: {}]
  %s3 = inlined_call_operand.hbm [shape: f32[8,256], index: 3, kind: output, shape index: {}]
  %s4 = sld [smem:[#allocation0]]
  $region30: #{tpu_custom_call.1} parent=0
    _
  %s6 = ssub.s32 1, %s4
  %s7 = scalar_select 0, %s6, %s4
  $region1: #{tpu_custom_call.1} parent=0
    #allocation2 [shape = 'u8[4096]{0}', space=vmem, size = 0x1000, scoped, tag = 'input window, operand 0, single buffered']
    #allocation3 [shape = 's32[1]{0}', space=sflag, size = 0x4, scoped, tag = 'scoped memory for tpu_custom_call.1']
    #allocation4 [shape = 's32[1]{0}', space=sflag, size = 0x4, scoped, tag = 'scoped memory for tpu_custom_call.1']
    #allocation5 [shape = 'u8[131072]{0}', space=vmem, size = 0x20000, scoped, tag = 'input window, operand 1, single buffered']
    #allocation6 [shape = 's32[1]{0}', space=sflag, size = 0x4, scoped, tag = 'scoped memory for tpu_custom_call.1']
    #allocation7 [shape = 'u8[8192]{0}', space=vmem, size = 0x2000, scoped, tag = 'output window, operand 0, single buffered']
    %8 = vsyncpa [#allocation3], 0
    %9 = vsyncpa [#allocation6], 0
    %10 = vsyncpa [#allocation4], 0
    // Predicated region
    $region2: #{tpu_custom_call.1} parent=1 // pred_check
      _
    $region3: #{tpu_custom_call.1} parent=1 // pred_check_branch
      %12 = sbr.rel (0) target = $region5
    $region4: #{tpu_custom_call.1} parent=1 // pred_region
      %s14 = ssub.s32 128, 128
      %15 = vsyncadd [#allocation3], %s14
      %s17 = sshll.u32 [#allocation2], 4
      %s18 = int_to_ptr.vmem [resolvable:$true] %s17
      %20 = dma.hbm_to_vmem [thread:$0]  %s0, 128, %s18, [#allocation3]
    $region5: #{tpu_custom_call.1} parent=1 // pred_fallthru
      _
    // Predicated region
    $region6: #{tpu_custom_call.1} parent=1 // pred_check
      _
    $region7: #{tpu_custom_call.1} parent=1 // pred_check_branch
      %22 = sbr.rel (0) target = $region9
    $region8: #{tpu_custom_call.1} parent=1 // pred_region
      %s24 = ssub.s32 4096, 4096
      %25 = vsyncadd [#allocation6], %s24
      %s26 = sshll.u32 [#allocation5], 4
      %s27 = int_to_ptr.vmem [resolvable:$true] %s26
      %32 = dma.hbm_to_vmem [thread:$0]  %s1, 4096, %s27, [#allocation6], 256, 256, 16
    $region9: #{tpu_custom_call.1} parent=1 // pred_fallthru
      _
    // Predicated region
    $region10: #{tpu_custom_call.1} parent=1 // pred_check
      _
    $region11: #{tpu_custom_call.1} parent=1 // pred_check_branch
      %34 = sbr.rel (0) target = $region13
    $region12: #{tpu_custom_call.1} parent=1 // pred_region
      _
    $region13: #{tpu_custom_call.1} parent=1 // pred_fallthru
      _
    // Predicated region
    $region14: #{tpu_custom_call.1} parent=1 // pred_check
      _
    $region15: #{tpu_custom_call.1} parent=1 // pred_check_branch
      %36 = sbr.rel (0) target = $region17
    $region16: #{tpu_custom_call.1} parent=1 // pred_region
      %37 = dma.done [#allocation3], 128
    $region17: #{tpu_custom_call.1} parent=1 // pred_fallthru
      _
    // Predicated region
    $region18: #{tpu_custom_call.1} parent=1 // pred_check
      _
    $region19: #{tpu_custom_call.1} parent=1 // pred_check_branch
      %39 = sbr.rel (0) target = $region21
    $region20: #{tpu_custom_call.1} parent=1 // pred_region
      %40 = dma.done [#allocation6], 4096
    $region21: #{tpu_custom_call.1} parent=1 // pred_fallthru
      _
    %v41 = vld [vmem:[#allocation2] sm:$0xff]
    %v42 = vld [vmem:[#allocation5] sm:$0xff]
    %v43 = vld [vmem:[#allocation5 + $0x8] sm:$0xff]
    %v44 = vld [vmem:[#allocation5 + $0x10] sm:$0xff]
    %v45 = vld [vmem:[#allocation5 + $0x18] sm:$0xff]
    %v46 = vld [vmem:[#allocation5 + $0x20] sm:$0xff]
    %v47 = vld [vmem:[#allocation5 + $0x28] sm:$0xff]
    %v48 = vld [vmem:[#allocation5 + $0x30] sm:$0xff]
    %v49 = vld [vmem:[#allocation5 + $0x38] sm:$0xff]
    %v50 = vld [vmem:[#allocation5 + $0x40] sm:$0xff]
    %v51 = vld [vmem:[#allocation5 + $0x48] sm:$0xff]
    %v52 = vld [vmem:[#allocation5 + $0x50] sm:$0xff]
    %v53 = vld [vmem:[#allocation5 + $0x58] sm:$0xff]
    %v54 = vld [vmem:[#allocation5 + $0x60] sm:$0xff]
    %v55 = vld [vmem:[#allocation5 + $0x68] sm:$0xff]
    %v56 = vld [vmem:[#allocation5 + $0x70] sm:$0xff]
    %v57 = vld [vmem:[#allocation5 + $0x78] sm:$0xff]
    %v58 = vld [vmem:[#allocation5 + $0x80] sm:$0xff]
    %v59 = vld [vmem:[#allocation5 + $0x88] sm:$0xff]
    %v60 = vld [vmem:[#allocation5 + $0x90] sm:$0xff]
    %v61 = vld [vmem:[#allocation5 + $0x98] sm:$0xff]
    %v62 = vld [vmem:[#allocation5 + $0xa0] sm:$0xff]
    %v63 = vld [vmem:[#allocation5 + $0xa8] sm:$0xff]
    %v64 = vld [vmem:[#allocation5 + $0xb0] sm:$0xff]
    %v65 = vld [vmem:[#allocation5 + $0xb8] sm:$0xff]
    %v66 = vld [vmem:[#allocation5 + $0xc0] sm:$0xff]
    %v67 = vld [vmem:[#allocation5 + $0xc8] sm:$0xff]
    %v68 = vld [vmem:[#allocation5 + $0xd0] sm:$0xff]
    %v69 = vld [vmem:[#allocation5 + $0xd8] sm:$0xff]
    %v70 = vld [vmem:[#allocation5 + $0xe0] sm:$0xff]
    %v71 = vld [vmem:[#allocation5 + $0xe8] sm:$0xff]
    %v72 = vld [vmem:[#allocation5 + $0xf0] sm:$0xff]
    %v73 = vld [vmem:[#allocation5 + $0xf8] sm:$0xff]
    %v74 = vld [vmem:[%s2] sm:$0x3]
    %v76 = vlaneseq
    %v77 = vshrl.u32 %v76, 7
    %v78 = vsub.s32 0, %v77
    %v79 = vrot.slane %v74, %v78
    %v80 = vlaneseq
    %v81 = vshrl.u32 %v80, 7
    %v82 = vsub.s32 1, %v81
    %v83 = vrot.slane %v74, %v82
    %86 = vmatprep.subr.mxu0 %v73
    %87 = vmatpush1.msra.mxu0 %v72
    %88 = vmatprep.subr.mxu0 %v71
    %89 = vmatpush1.msra.mxu0 %v70
    %90 = vmatprep.subr.mxu0 %v69
    %91 = vmatpush1.msra.mxu0 %v68
    %92 = vmatprep.subr.mxu0 %v67
    %93 = vmatpush1.msra.mxu0 %v66
    %94 = vmatprep.subr.mxu0 %v65
    %95 = vmatpush1.msra.mxu0 %v64
    %96 = vmatprep.subr.mxu0 %v63
    %97 = vmatpush1.msra.mxu0 %v62
    %98 = vmatprep.subr.mxu0 %v61
    %99 = vmatpush1.msra.mxu0 %v60
    %100 = vmatprep.subr.mxu0 %v59
    %101 = vmatpush1.msra.mxu0 %v58
    %102 = vmatprep.subr.mxu0 %v57
    %103 = vmatpush1.msra.mxu0 %v56
    %104 = vmatprep.subr.mxu0 %v55
    %105 = vmatpush1.msra.mxu0 %v54
    %106 = vmatprep.subr.mxu0 %v53
    %107 = vmatpush1.msra.mxu0 %v52
    %108 = vmatprep.subr.mxu0 %v51
    %109 = vmatpush1.msra.mxu0 %v50
    %110 = vmatprep.subr.mxu0 %v49
    %111 = vmatpush1.msra.mxu0 %v48
    %112 = vmatprep.subr.mxu0 %v47
    %113 = vmatpush1.msra.mxu0 %v46
    %114 = vmatprep.subr.mxu0 %v45
    %115 = vmatpush1.msra.mxu0 %v44
    %116 = vmatprep.subr.mxu0 %v43
    %117 = vmatpush1.msra.mxu0 %v42
    %118 = vmatprep.subr.mxu0 0.0
    %119 = vmatpush2.msra.mxu0 0.0
    %120 = vmatprep.subr.mxu0 0.0
    %121 = vmatpush2.msra.mxu0 0.0
    %122 = vmatprep.subr.mxu0 0.0
    %123 = vmatpush2.msra.mxu0 0.0
    %124 = vmatprep.subr.mxu0 0.0
    %125 = vmatpush2.msra.mxu0 0.0
    %126 = vmatprep.subr.mxu0 0.0
    %127 = vmatpush2.msra.mxu0 0.0
    %128 = vmatprep.subr.mxu0 0.0
    %129 = vmatpush2.msra.mxu0 0.0
    %130 = vmatprep.subr.mxu0 0.0
    %131 = vmatpush2.msra.mxu0 0.0
    %132 = vmatprep.subr.mxu0 0.0
    %133 = vmatpush2.msra.mxu0 0.0
    %134 = vmatprep.subr.mxu0 0.0
    %135 = vmatpush2.msra.mxu0 0.0
    %136 = vmatprep.subr.mxu0 0.0
    %137 = vmatpush2.msra.mxu0 0.0
    %138 = vmatprep.subr.mxu0 0.0
    %139 = vmatpush2.msra.mxu0 0.0
    %140 = vmatprep.subr.mxu0 0.0
    %141 = vmatpush2.msra.mxu0 0.0
    %142 = vmatprep.subr.mxu0 0.0
    %143 = vmatpush2.msra.mxu0 0.0
    %144 = vmatprep.subr.mxu0 0.0
    %145 = vmatpush2.msra.mxu0 0.0
    %146 = vmatprep.subr.mxu0 0.0
    %147 = vmatpush2.msra.mxu0 0.0
    %148 = vmatprep.subr.mxu0 0.0
    %149 = vmatpush2.msra.mxu0 0.0
    %150 = vmatprep.mubr.f32.mxu0 0.0
    %151 = vmatmul.mubr.f32.gmra.mxu0 %v41
    %v152 = vpop.f32.mrf.mxu0
    %v153 = vadd.f32 %v79, %v152
    %v154 = vpop.f32.mrf.mxu0
    %v155 = vadd.f32 %v83, %v154
    %156 = vdwg.mxu0
    %157 = vst [vmem:[#allocation7] sm:$0xff] %v153
    %158 = vst [vmem:[#allocation7 + $0x8] sm:$0xff] %v155
    // Predicated region
    $region22: #{tpu_custom_call.1} parent=1 // pred_check
      _
    $region23: #{tpu_custom_call.1} parent=1 // pred_check_branch
      %160 = sbr.rel (0) target = $region25
    $region24: #{tpu_custom_call.1} parent=1 // pred_region
      %s162 = ssub.s32 256, 256
      %163 = vsyncadd [#allocation4], %s162
      %s165 = sshll.u32 [#allocation7], 4
      %s166 = int_to_ptr.vmem [resolvable:$true] %s165
      %168 = dma.vmem_to_hbm [thread:$0]  %s166, 256, %s3, [#allocation4]
    $region25: #{tpu_custom_call.1} parent=1 // pred_fallthru
      _
    // Predicated region
    $region26: #{tpu_custom_call.1} parent=1 // pred_check
      _
    $region27: #{tpu_custom_call.1} parent=1 // pred_check_branch
      %170 = sbr.rel (0) target = $region29
    $region28: #{tpu_custom_call.1} parent=1 // pred_region
      %171 = dma.done [#allocation4], 256
    $region29: #{tpu_custom_call.1} parent=1 // pred_fallthru
      _
    %172 = vsyncpa [#allocation3], 1
    %173 = vsyncpa [#allocation6], 1
    %174 = vsyncpa [#allocation4], 1

</llo_original>
